<compile_context>
chip_gen: v7x
topology: tpu7x:2x2x1
jax: 0.10.0
libtpu: 0.0.40
codegen_flags: <defaults>
</compile_context>

<pallas_src>
import math

import jax
import jax.numpy as jnp
from jax import lax
from jax.experimental import pallas as pl
from jax.experimental.pallas import tpu as pltpu


def _round_up(x, m):
    return ((x + m - 1) // m) * m


def _vmem_limit_bytes():
    # Generation-aware VMEM budget: ~3/4 of physical VMEM, capped at 100 MiB.
    # (v5e/v6e: 128 MiB physical; v7x: 64 MiB -> ~48 MiB budget.)
    default_cap = 64 * 1024 * 1024
    try:
        info = pltpu.get_tpu_info()
        cap = int(getattr(info, "vmem_capacity_bytes", default_cap))
    except Exception:
        cap = default_cap
    return int(min(cap * 3 // 4, 100 * 1024 * 1024))


# --------------------------------------------------------------------------- #
# Kernel 1: one-shot ternarization of the weight into int8 codes {-1, 0, +1}.  #
# Reads the UNPADDED f32 weight (partial edge blocks allowed); writes padded   #
# (Np, Kp) int8 codes. Any garbage in the out-of-bounds region of an input     #
# tile (incl. NaN/Inf) maps to a finite code via the where(), so it is safe.   #
# --------------------------------------------------------------------------- #
def _ternary_quantize_kernel(w_ref, scal_ref, o_ref):
    w = w_ref[...]                           # (tn, tk) f32 weight tile
    delta = scal_ref[0]                      # global threshold (SMEM scalar)
    w_t = jnp.where(w > delta, 1.0, jnp.where(w < -delta, -1.0, 0.0))
    o_ref[...] = w_t.astype(o_ref.dtype)     # int8 codes, 1 B/elem in HBM


# --------------------------------------------------------------------------- #
# Kernel 2: tiled matmul  y = (x @ W_t.T) * alpha + bias   (pre-quantized W_t)  #
# --------------------------------------------------------------------------- #
def _ternary_matmul_kernel(x_ref, w_ref, scal_ref, b_ref, o_ref, acc_ref):
    k = pl.program_id(2)

    @pl.when(k == 0)
    def _init():
        acc_ref[...] = jnp.zeros_like(acc_ref)

    x = x_ref[...]                            # (tm, tk) bf16 activations
    w = w_ref[...].astype(jnp.bfloat16)       # (tn, tk) int8 codes -> bf16 (VPU)
    # Contract dim 1 of both operands: the (tn, tk) weight tile is consumed by
    # the MXU directly, no materialized transpose; f32 accumulation.
    acc_ref[...] += lax.dot_general(
        x, w,
        dimension_numbers=(((1,), (1,)), ((), ())),
        preferred_element_type=jnp.float32,
    )

    @pl.when(k == pl.num_programs(2) - 1)
    def _finalize():
        alpha = scal_ref[1]                             # SMEM scalar
        out = acc_ref[...] * alpha + b_ref[...]         # (tm, tn) + (1, tn)
        o_ref[...] = out.astype(o_ref.dtype)


# --------------------------------------------------------------------------- #
# Kernel 3: decode / small-M path — ternarize the f32 weight tile in-kernel     #
# (each weight tile is consumed exactly once, so a separate quantize pass      #
# would only add traffic).                                                     #
# --------------------------------------------------------------------------- #
def _ternary_matmul_fused_kernel(x_ref, w_ref, scal_ref, b_ref, o_ref, acc_ref):
    k = pl.program_id(2)

    @pl.when(k == 0)
    def _init():
        acc_ref[...] = jnp.zeros_like(acc_ref)

    delta = scal_ref[0]
    w = w_ref[...]                            # (tn, tk) f32 weight tile
    w_t = jnp.where(w > delta, 1.0,
                    jnp.where(w < -delta, -1.0, 0.0)).astype(jnp.bfloat16)
    x = x_ref[...]                            # (tm, tk) bf16 activations
    acc_ref[...] += lax.dot_general(
        x, w_t,
        dimension_numbers=(((1,), (1,)), ((), ())),
        preferred_element_type=jnp.float32,
    )

    @pl.when(k == pl.num_programs(2) - 1)
    def _finalize():
        alpha = scal_ref[1]
        out = acc_ref[...] * alpha + b_ref[...]
        o_ref[...] = out.astype(o_ref.dtype)


def ternary_linear(x, weight, alpha, bias=None, *,
                   block_m=512, block_n=512, block_k=1024, out_dtype=None):
    """x: (..., K); weight: (N, K); alpha: scalar/(1,); bias: (N,) or None."""
    N, K = weight.shape
    lead = x.shape[:-1]
    x2 = x.reshape(-1, K)
    M = x2.shape[0]
    out_dtype = x.dtype if out_dtype is None else out_dtype

    weight = weight.astype(jnp.float32)
    # Global threshold: computed once over the WHOLE weight (one XLA reduction).
    delta = 0.7 * jnp.mean(jnp.abs(weight))
    alpha_s = jnp.asarray(alpha, jnp.float32).reshape(())
    scal = jnp.stack([delta, alpha_s])        # (2,) SMEM scalars [delta, alpha]

    # ---- tile sizes ----------------------------------------------------------
    tm = min(block_m, _round_up(M, 16))       # 16: bf16 sublane packing
    tk = min(block_k, _round_up(K, 128))
    tn = min(block_n, _round_up(N, 128))
    m_blocks = _round_up(M, tm) // tm
    # Megacore: for decode-shaped calls (one M block) keep >=2 N blocks so both
    # TensorCores on v7x get work along a 'parallel' axis.
    if m_blocks == 1 and (_round_up(N, tn) // tn) < 2 and tn >= 256:
        tn = _round_up(tn // 2, 128)
    Mp, Np, Kp = _round_up(M, tm), _round_up(N, tn), _round_up(K, tk)

    # ---- activations: bf16, padded only when required ------------------------
    # (K padding MUST be exact zeros so garbage weight-code columns contribute 0)
    if (Mp, Kp) != (M, K):
        x_p = jnp.pad(x2.astype(jnp.bfloat16), ((0, Mp - M), (0, Kp - K)))
    else:
        x_p = x2.astype(jnp.bfloat16)

    if bias is None:
        b_row = jnp.zeros((1, Np), jnp.float32)
    else:
        b_row = jnp.pad(bias.astype(jnp.float32), (0, Np - N)).reshape(1, Np)

    vmem_limit = _vmem_limit_bytes()
    use_fused = (Mp // tm == 1)               # each weight tile consumed once

    if use_fused:
        kernel = _ternary_matmul_fused_kernel
        w_arg = weight                         # raw (N, K) f32, no quantize pass
    else:
        # ---- quantize the weight once into int8 ternary codes ----------------
        w_arg = pl.pallas_call(
            _ternary_quantize_kernel,
            out_shape=jax.ShapeDtypeStruct((Np, Kp), jnp.int8),
            grid=(Np // tn, Kp // tk),
            in_specs=[
                pl.BlockSpec((tn, tk), lambda i, j: (i, j)),   # raw weight
                pl.BlockSpec(memory_space=pltpu.SMEM),         # [delta, alpha]
            ],
            out_specs=pl.BlockSpec((tn, tk), lambda i, j: (i, j)),
            compiler_params=pltpu.CompilerParams(
                dimension_semantics=("parallel", "parallel"),
                vmem_limit_bytes=vmem_limit),
        )(weight, scal)
        kernel = _ternary_matmul_kernel

    # ---- tiled, pipelined matmul with f32 accumulator + fused epilogue -------
    out_p = pl.pallas_call(
        kernel,
        out_shape=jax.ShapeDtypeStruct((Mp, Np), out_dtype),
        grid=(Mp // tm, Np // tn, Kp // tk),
        in_specs=[
            pl.BlockSpec((tm, tk), lambda i, j, k: (i, k)),    # bf16 activations
            pl.BlockSpec((tn, tk), lambda i, j, k: (j, k)),    # codes / raw W
            pl.BlockSpec(memory_space=pltpu.SMEM),             # [delta, alpha]
            pl.BlockSpec((1, tn), lambda i, j, k: (0, j)),     # bias row
        ],
        out_specs=pl.BlockSpec((tm, tn), lambda i, j, k: (i, j)),
        scratch_shapes=[pltpu.VMEM((tm, tn), jnp.float32)],
        compiler_params=pltpu.CompilerParams(
            dimension_semantics=("parallel", "parallel", "arbitrary"),
            vmem_limit_bytes=vmem_limit),
    )(x_p, w_arg, scal, b_row)

    return out_p[:M, :N].reshape(lead + (N,))


if __name__ == "__main__":
    def reference(x, weight, alpha, bias):
        delta = 0.7 * jnp.mean(jnp.abs(weight))
        w_t = jnp.where(weight > delta, 1.0, jnp.where(weight < -delta, -1.0, 0.0))
        y = x @ (w_t * jnp.reshape(alpha, ())).T
        return y if bias is None else y + bias

    def reference_bf16_act(x, weight, alpha, bias):
        # Same math with the activation rounded to bf16, matching the kernel's
        # (exact ternary weight, bf16 activation, f32 accumulate) MXU path.
        xb = x.astype(jnp.bfloat16).astype(jnp.float32)
        return reference(xb, weight, alpha, bias)

    def check(y, x, weight, alpha, bias):
        assert jnp.allclose(y, reference_bf16_act(x, weight, alpha, bias),
                            rtol=1e-3, atol=1e-3), "mismatch vs bf16-act reference"
        assert jnp.allclose(y, reference(x, weight, alpha, bias),
                            rtol=2e-2, atol=2e-1), "mismatch vs f32 reference"

    # ---- test 1: multi-tile grid, pre-quantized int8-code path --------------
    in_features, out_features = 256, 256
    batch, seq = 2, 64
    k_w, k_b, k_x = jax.random.split(jax.random.PRNGKey(0), 3)
    bound = 1.0 / math.sqrt(in_features)   # kaiming_uniform_(a=sqrt(5)) on (N, K)
    weight = jax.random.uniform(k_w, (out_features, in_features), jnp.float32,
                                -bound, bound)
    bias = jax.random.uniform(k_b, (out_features,), jnp.float32, -bound, bound)
    alpha = jnp.array([0.75], jnp.float32)
    x = jax.random.normal(k_x, (batch, seq, in_features), jnp.float32)

    y = ternary_linear(x, weight, alpha, bias,
                       block_m=64, block_n=128, block_k=128)
    y = jax.block_until_ready(y)
    assert y.shape == (batch, seq, out_features)
    check(y, x, weight, alpha, bias)

    # ---- test 2: decode-shaped call (fused ternarize + megacore N split) ----
    in_features, out_features = 256, 384
    batch, seq = 1, 4
    k_w, k_b, k_x = jax.random.split(jax.random.PRNGKey(1), 3)
    bound = 1.0 / math.sqrt(in_features)
    weight = jax.random.uniform(k_w, (out_features, in_features), jnp.float32,
                                -bound, bound)
    bias = jax.random.uniform(k_b, (out_features,), jnp.float32, -bound, bound)
    alpha = jnp.array([1.25], jnp.float32)
    x = jax.random.normal(k_x, (batch, seq, in_features), jnp.float32)

    y = ternary_linear(x, weight, alpha, bias)      # default (big) tile caps
    y = jax.block_until_ready(y)
    assert y.shape == (batch, seq, out_features)
    check(y, x, weight, alpha, bias)

    # ---- test 3: toy 32x32 layer (partial-block / lane-padding path) --------
    in_features, out_features = 32, 32
    batch, seq = 2, 8
    k_w, k_b, k_x = jax.random.split(jax.random.PRNGKey(2), 3)
    bound = 1.0 / math.sqrt(in_features)
    weight = jax.random.uniform(k_w, (out_features, in_features), jnp.float32,
                                -bound, bound)
    bias = jax.random.uniform(k_b, (out_features,), jnp.float32, -bound, bound)
    alpha = jnp.ones((1,), jnp.float32)             # module init: alpha = 1.0
    x = jax.random.normal(k_x, (batch, seq, in_features), jnp.float32)

    y = ternary_linear(x, weight, alpha, bias)
    y = jax.block_until_ready(y)
    assert y.shape == (batch, seq, out_features)
    check(y, x, weight, alpha, bias)

    print("KERNEL_OK")
</pallas_src>

<mosaic_0001>
module attributes {stable_mosaic.version = 11 : i64} {
  func.func @_ternary_quantize_kernel(%arg0: i32, %arg1: i32, %arg2: memref<128x128xf32, #tpu.memory_space<vmem>>, %arg3: memref<2xf32, #tpu.memory_space<smem>>, %arg4: memref<128x128xi8, #tpu.memory_space<vmem>>) attributes {dimension_semantics = [#tpu.dimension_semantics<parallel>, #tpu.dimension_semantics<parallel>], iteration_bounds = array<i64: 2, 2>, scalar_prefetch = 0 : i64, scratch_operands = 0 : i64, tpu.core_type = #tpu.core_type<tc>, window_params = [{transform_indices = @transform_0, window_bounds = array<i64: 128, 128>}, {transform_indices = @transform_1, window_bounds = array<i64: 2>}, {transform_indices = @transform_2, window_bounds = array<i64: 128, 128>}]} {
    %c0 = arith.constant 0 : index
    %c0_0 = arith.constant 0 : index
    %0 = vector.load %arg2[%c0, %c0_0] : memref<128x128xf32, #tpu.memory_space<vmem>>, vector<128x128xf32>
    %c0_1 = arith.constant 0 : index
    %1 = memref.load %arg3[%c0_1] : memref<2xf32, #tpu.memory_space<smem>>
    %2 = vector.broadcast %1 : f32 to vector<128x128xf32>
    %3 = arith.cmpf ogt, %0, %2 : vector<128x128xf32>
    %cst = arith.constant 0.000000e+00 : f32
    %4 = arith.subf %cst, %1 : f32
    %5 = vector.broadcast %4 : f32 to vector<128x128xf32>
    %6 = arith.cmpf olt, %0, %5 : vector<128x128xf32>
    %cst_2 = arith.constant -1.000000e+00 : f32
    %cst_3 = arith.constant 0.000000e+00 : f32
    %7 = vector.broadcast %cst_2 : f32 to vector<128x128xf32>
    %8 = vector.broadcast %cst_3 : f32 to vector<128x128xf32>
    %9 = arith.select %6, %7, %8 : vector<128x128xi1>, vector<128x128xf32>
    %cst_4 = arith.constant 1.000000e+00 : f32
    %10 = vector.broadcast %cst_4 : f32 to vector<128x128xf32>
    %11 = arith.select %3, %10, %9 : vector<128x128xi1>, vector<128x128xf32>
    %12 = arith.fptosi %11 : vector<128x128xf32> to vector<128x128xi8>
    %c0_5 = arith.constant 0 : index
    %c0_6 = arith.constant 0 : index
    %13 = vector.load %arg4[%c0_5, %c0_6] : memref<128x128xi8, #tpu.memory_space<vmem>>, vector<128x128xi8>
    tpu.vector_store %arg4[%c0_5, %c0_6], %12 {strides = array<i32>} : memref<128x128xi8, #tpu.memory_space<vmem>>, vector<128x128xi8>,
    return
  }
  func.func @transform_0(%arg0: i32, %arg1: i32) -> (i32, i32) {
    %c0_i32 = arith.constant 0 : i32
    return %arg0, %arg1 : i32, i32
  }
  func.func @transform_1(%arg0: i32, %arg1: i32) -> i32 {
    %c0_i32 = arith.constant 0 : i32
    %c0_i32_0 = arith.constant 0 : i32
    return %c0_i32 : i32
  }
  func.func @transform_2(%arg0: i32, %arg1: i32) -> (i32, i32) {
    %c0_i32 = arith.constant 0 : i32
    return %arg0, %arg1 : i32, i32
  }
}

</mosaic_0001>

<llo_original>
// kernel: tpu_custom_call.1
$region0: #{tpu_custom_call.1}
  #allocation0 [shape = 'u32[]', space=smem, size = 0x4, offset = 0x4, fixed_abs, tag = 'smem constant byte address 0x4 - core index']
  #allocation1 [shape = 'u32[144,128]{1,0:T(1,128)}', space=vmem, size = 0x12000, scoped, tag = 'internal scratch']
  %s0 = inlined_call_operand.hbm [shape: f32[256,256], index: 0, kind: input, shape index: {}]
  %s1 = inlined_call_operand.vmem [shape: f32[2], index: 1, kind: input, shape index: {}]
  %s2 = inlined_call_operand.hbm [shape: s8[256,256], index: 2, kind: output, shape index: {}]
  %s3 = sld [smem:[#allocation0]]
  $region49: #{tpu_custom_call.1} parent=0
    _
  %s5 = ssub.s32 1, %s3
  %s6 = scalar_select 0, %s5, %s3
  $region1: #{tpu_custom_call.1} parent=0
    #allocation2 [shape = 'u8[131072]{0}', space=vmem, size = 0x20000, scoped, tag = 'input window, operand 0']
    #allocation3 [shape = 's32[2]{0}', space=sflag, size = 0x8, scoped, tag = 'scoped memory for tpu_custom_call.1']
    #allocation4 [shape = 's32[2]{0}', space=sflag, size = 0x8, scoped, tag = 'scoped memory for tpu_custom_call.1']
    #allocation5 [shape = 's32[2]{0}', space=sflag, size = 0x8, scoped, tag = 'scoped memory for tpu_custom_call.1']
    #allocation6 [shape = 'u8[512]{0}', space=smem, size = 0x200, scoped, tag = 'input window, operand 1, single buffered']
    #allocation7 [shape = 'u8[32768]{0}', space=vmem, size = 0x8000, scoped, tag = 'output window, operand 0']
    %7 = vsyncpa [#allocation3], 0
    %s8 = scalar_lea.sflag [#allocation3], 1
    %9 = vsyncpa %s8, 0
    %10 = vsyncpa [#allocation5], 0
    %11 = vsyncpa [#allocation4], 0
    %s12 = scalar_lea.sflag [#allocation4], 1
    %13 = vsyncpa %s12, 0
    loop: start=0, step=1, limit=6
    $region2: #{tpu_custom_call.1} parent=1 // loop_pre_header
      _
    $region3: #{tpu_custom_call.1} parent=1 // loop_header
      %s15 = sphi 0, %s19
      %p16 = scmp.ge.s32.totalorder %s15, 6
      %s22 = sphi 0, %s34
      %s23 = sphi 0, %s30
      %s24 = sphi 0, %s22
      %s25 = sphi 0, %s23
      %s26 = sphi 0, %s24
      %s27 = sphi 0, %s25
      %s39 = sphi 0, %s41
      %s42 = sphi 0, %s39
      %s43 = sphi 0, %s42
      %s59 = sphi 0, %s43
      %s63 = sphi 0, %s63
      %s65 = sphi 0, %s63
      %s66 = sphi 0, %s65
      %s80 = sphi 0, %s66
      %s88 = sphi 0, %s90
      %s91 = sphi 0, %s88
      %s92 = sphi 0, %s91
      %s108 = sphi 0, %s92
    $region4: #{tpu_custom_call.1} parent=1 // loop_header_branch
      %18 = sbr.rel (%p16) target = $region8
    $region5: #{tpu_custom_call.1} parent=1 // loop_body
      %s20 = ssub.s32 %s15, 1
      %s21 = ssub.s32 %s15, 2
      %s28 = sadd.s32 1, %s23
      %p29 = scmp.ge.s32.totalorder %s28, 2
      %s30 = scalar_select %p29, 0, %s28
      %s31 = sadd.s32 1, %s22
      %s32 = scalar_select %p29, %s31, %s22
      %p33 = scmp.ge.s32.totalorder %s32, 2
      %s34 = scalar_select %p33, 0, %s32
      %s35 = ssub.s32 %s22, %s34
      %s36 = ssub.s32 %s23, %s30
      %s37 = sor.u32 %s35, %s36
      %p38 = scmp.eq.s32.totalorder %s37, 0
      %s40 = sadd.s32 %s39, 1
      %s41 = scalar_select %p38, %s39, %s40
      %p44 = pneg %p38
      %p45 = scmp.eq.s32.totalorder %s15, 3
      %p46 = por %p44, %p45
      %p47 = scmp.ne.s32.totalorder %s39, %s42
      %p48 = scmp.eq.s32.totalorder %s15, 0
      %p49 = por %p47, %p48
      %p50 = scmp.ne.s32.totalorder %s39, %s42
      %p51 = scmp.eq.s32.totalorder %s20, 3
      %p52 = por %p50, %p51
      %p53 = scmp.ne.s32.totalorder %s42, %s43
      %p54 = scmp.eq.s32.totalorder %s20, 0
      %p55 = por %p53, %p54
      %p56 = scmp.ne.s32.totalorder %s42, %s43
      %p57 = scmp.eq.s32.totalorder %s21, 3
      %p58 = por %p56, %p57
      %p60 = scmp.ne.s32.totalorder %s43, %s59
      %p61 = scmp.eq.s32.totalorder %s21, 0
      %p62 = por %p60, %p61
      %s64 = sadd.s32 %s63, 1
      %p67 = scmp.eq.s32.totalorder %s15, 3
      %p68 = scmp.ne.s32.totalorder %s63, %s65
      %p69 = scmp.eq.s32.totalorder %s15, 0
      %p70 = por %p68, %p69
      %p71 = scmp.ne.s32.totalorder %s63, %s65
      %p72 = scmp.eq.s32.totalorder %s20, 3
      %p73 = por %p71, %p72
      %p74 = scmp.ne.s32.totalorder %s65, %s66
      %p75 = scmp.eq.s32.totalorder %s20, 0
      %p76 = por %p74, %p75
      %p77 = scmp.ne.s32.totalorder %s65, %s66
      %p78 = scmp.eq.s32.totalorder %s21, 3
      %p79 = por %p77, %p78
      %p81 = scmp.ne.s32.totalorder %s66, %s80
      %p82 = scmp.eq.s32.totalorder %s21, 0
      %p83 = por %p81, %p82
      %s84 = ssub.s32 %s22, %s34
      %s85 = ssub.s32 %s23, %s30
      %s86 = sor.u32 %s84, %s85
      %p87 = scmp.eq.s32.totalorder %s86, 0
      %s89 = sadd.s32 %s88, 1
      %s90 = scalar_select %p87, %s88, %s89
      %p93 = pneg %p87
      %p94 = scmp.eq.s32.totalorder %s15, 3
      %p95 = por %p93, %p94
      %p96 = scmp.ne.s32.totalorder %s88, %s91
      %p97 = scmp.eq.s32.totalorder %s15, 0
      %p98 = por %p96, %p97
      %p99 = scmp.ne.s32.totalorder %s88, %s91
      %p100 = scmp.eq.s32.totalorder %s20, 3
      %p101 = por %p99, %p100
      %p102 = scmp.ne.s32.totalorder %s91, %s92
      %p103 = scmp.eq.s32.totalorder %s20, 0
      %p104 = por %p102, %p103
      %p105 = scmp.ne.s32.totalorder %s91, %s92
      %p106 = scmp.eq.s32.totalorder %s21, 3
      %p107 = por %p105, %p106
      %p109 = scmp.ne.s32.totalorder %s92, %s108
      %p110 = scmp.eq.s32.totalorder %s21, 0
      %p111 = por %p109, %p110
      %p112 = scmp.le.s32.totalorder 1, %s15
      %p113 = scmp.lt.s32.totalorder %s15, 5
      %p114 = pnand %p112, %p113
      %p115 = pneg %p114
      // Predicated region
      $region9: #{tpu_custom_call.1} parent=5 // pred_check
        _
      $region10: #{tpu_custom_call.1} parent=5 // pred_check_branch
        %117 = sbr.rel (%p114) target = $region12
      $region11: #{tpu_custom_call.1} parent=5 // pred_region
        %s118 = ssub.s32 %s15, 1
        // Predicated region
        $region13: #{tpu_custom_call.1} parent=11 // pred_check
          %p119 = pneg %p76
        $region14: #{tpu_custom_call.1} parent=11 // pred_check_branch
          %121 = sbr.rel (%p119) target = $region16
        $region15: #{tpu_custom_call.1} parent=11 // pred_region
          %s123 = ssub.s32 16, 16
          %124 = vsyncadd [#allocation5], %s123
          %s126 = sshll.u32 %s1, 4
          %s127 = int_to_ptr.vmem [resolvable:$true] %s126
          %129 = dma.vmem_to_smem %s127, 16, [#allocation6], [#allocation5]
        $region16: #{tpu_custom_call.1} parent=11 // pred_fallthru
          _
      $region12: #{tpu_custom_call.1} parent=5 // pred_fallthru
        _
      %p130 = scmp.lt.s32.totalorder %s15, 4
      // Predicated region
      $region17: #{tpu_custom_call.1} parent=5 // pred_check
        %p131 = pneg %p130
      $region18: #{tpu_custom_call.1} parent=5 // pred_check_branch
        %133 = sbr.rel (%p131) target = $region20
      $region19: #{tpu_custom_call.1} parent=5 // pred_region
        // Predicated region
        $region21: #{tpu_custom_call.1} parent=19 // pred_check
          %p134 = pneg %p49
        $region22: #{tpu_custom_call.1} parent=19 // pred_check_branch
          %136 = sbr.rel (%p134) target = $region24
        $region23: #{tpu_custom_call.1} parent=19 // pred_region
          %s137 = sand.u32 %s39, 1
          %s138 = scalar_lea.sflag [#allocation3], %s137
          %s139 = sand.u32 %s39, 1
          %s140 = smul.addr %s139, 128
          %s141 = scalar_lea.vmem [#allocation2], %s140
          %s142 = smul.u32 16, %s22
          %s144 = ssub.s32 2048, 2048
          %145 = vsyncadd %s138, %s144
          %s146 = smul.addr %s142, 2
          %s147 = sadd.s32 %s23, %s146
          %s148 = smul.addr %s147, 128
          %s149 = scalar_lea.hbm %s0, %s148
          %s150 = sshll.u32 %s141, 4
          %s151 = int_to_ptr.vmem [resolvable:$true] %s150
          %156 = dma.hbm_to_vmem [thread:$0]  %s149, 2048, %s151, %s138, 256, 128, 8
        $region24: #{tpu_custom_call.1} parent=19 // pred_fallthru
          _
      $region20: #{tpu_custom_call.1} parent=5 // pred_fallthru
        _
      %p157 = scmp.le.s32.totalorder 1, %s15
      %p158 = scmp.lt.s32.totalorder %s15, 5
      %p159 = pnand %p157, %p158
      %p160 = pneg %p159
      // Predicated region
      $region25: #{tpu_custom_call.1} parent=5 // pred_check
        _
      $region26: #{tpu_custom_call.1} parent=5 // pred_check_branch
        %162 = sbr.rel (%p159) target = $region28
      $region27: #{tpu_custom_call.1} parent=5 // pred_region
        %s163 = ssub.s32 %s15, 1
        %s164 = sand.u32 %s42, 1
        %s165 = scalar_lea.sflag [#allocation3], %s164
        %s166 = sand.u32 %s42, 1
        %s167 = smul.addr %s166, 128
        %s168 = scalar_lea.vmem [#allocation2], %s167
        // Predicated region
        $region29: #{tpu_custom_call.1} parent=27 // pred_check
          %p169 = pneg %p55
        $region30: #{tpu_custom_call.1} parent=27 // pred_check_branch
          %171 = sbr.rel (%p169) target = $region32
        $region31: #{tpu_custom_call.1} parent=27 // pred_region
          %172 = dma.done %s165, 2048
        $region32: #{tpu_custom_call.1} parent=27 // pred_fallthru
          _
        // Predicated region
        $region33: #{tpu_custom_call.1} parent=27 // pred_check
          %p173 = pneg %p76
        $region34: #{tpu_custom_call.1} parent=27 // pred_check_branch
          %175 = sbr.rel (%p173) target = $region36
        $region35: #{tpu_custom_call.1} parent=27 // pred_region
          %176 = dma.done [#allocation5], 16
        $region36: #{tpu_custom_call.1} parent=27 // pred_fallthru
          _
        %177 = sfence
        %s178 = sand.u32 %s42, 1
        %s179 = scalar_lea.sflag [#allocation3], %s178
        %s180 = sand.u32 %s42, 1
        %s181 = smul.addr %s180, 128
        %s182 = scalar_lea.vmem [#allocation2], %s181
        %p183 = pneg %p55
        %p184 = pneg %p52
        %p185 = pneg %p76
        %p186 = pneg %p73
        %p187 = pneg %p104
        %p188 = pneg %p101
        %s189 = sand.u32 %s91, 1
        %s190 = scalar_lea.sflag [#allocation4], %s189
        %s191 = sand.u32 %s91, 1
        %s192 = smul.addr %s191, 32
        %s193 = scalar_lea.vmem [#allocation7], %s192
        %s194 = smul.u32 16, %s24
        %s195 = smul.u32 4, %s24
        %v196 = vld [vmem:[%s168] sm:$0xff]
        %v197 = vld [vmem:[%s168 + $0x8] sm:$0xff]
        %v198 = vld [vmem:[%s168 + $0x10] sm:$0xff]
        %v199 = vld [vmem:[%s168 + $0x18] sm:$0xff]
        %v200 = vld [vmem:[%s168 + $0x20] sm:$0xff]
        %v201 = vld [vmem:[%s168 + $0x28] sm:$0xff]
        %v202 = vld [vmem:[%s168 + $0x30] sm:$0xff]
        %v203 = vld [vmem:[%s168 + $0x38] sm:$0xff]
        %v204 = vld [vmem:[%s168 + $0x40] sm:$0xff]
        %v205 = vld [vmem:[%s168 + $0x48] sm:$0xff]
        %v206 = vld [vmem:[%s168 + $0x50] sm:$0xff]
        %v207 = vld [vmem:[%s168 + $0x58] sm:$0xff]
        %v208 = vld [vmem:[%s168 + $0x60] sm:$0xff]
        %v209 = vld [vmem:[%s168 + $0x68] sm:$0xff]
        %v210 = vld [vmem:[%s168 + $0x70] sm:$0xff]
        %v211 = vld [vmem:[%s168 + $0x78] sm:$0xff]
        %s212 = sld [smem:[#allocation6]]
        %v213 = vstv %s212
        %vm214 = vcmp.gt.f32.partialorder %v196, %v213
        %vm215 = vcmp.gt.f32.partialorder %v197, %v213
        %vm216 = vcmp.gt.f32.partialorder %v198, %v213
        %vm217 = vcmp.gt.f32.partialorder %v199, %v213
        %vm218 = vcmp.gt.f32.partialorder %v200, %v213
        %vm219 = vcmp.gt.f32.partialorder %v201, %v213
        %vm220 = vcmp.gt.f32.partialorder %v202, %v213
        %vm221 = vcmp.gt.f32.partialorder %v203, %v213
        %vm222 = vcmp.gt.f32.partialorder %v204, %v213
        %vm223 = vcmp.gt.f32.partialorder %v205, %v213
        %vm224 = vcmp.gt.f32.partialorder %v206, %v213
        %vm225 = vcmp.gt.f32.partialorder %v207, %v213
        %vm226 = vcmp.gt.f32.partialorder %v208, %v213
        %vm227 = vcmp.gt.f32.partialorder %v209, %v213
        %vm228 = vcmp.gt.f32.partialorder %v210, %v213
        %vm229 = vcmp.gt.f32.partialorder %v211, %v213
        %s230 = ssub.f32 0.0, %s212
        %v231 = vstv %s230
        %vm232 = vcmp.lt.f32.partialorder %v196, %v231
        %vm233 = vcmp.lt.f32.partialorder %v197, %v231
        %vm234 = vcmp.lt.f32.partialorder %v198, %v231
        %vm235 = vcmp.lt.f32.partialorder %v199, %v231
        %vm236 = vcmp.lt.f32.partialorder %v200, %v231
        %vm237 = vcmp.lt.f32.partialorder %v201, %v231
        %vm238 = vcmp.lt.f32.partialorder %v202, %v231
        %vm239 = vcmp.lt.f32.partialorder %v203, %v231
        %vm240 = vcmp.lt.f32.partialorder %v204, %v231
        %vm241 = vcmp.lt.f32.partialorder %v205, %v231
        %vm242 = vcmp.lt.f32.partialorder %v206, %v231
        %vm243 = vcmp.lt.f32.partialorder %v207, %v231
        %vm244 = vcmp.lt.f32.partialorder %v208, %v231
        %vm245 = vcmp.lt.f32.partialorder %v209, %v231
        %vm246 = vcmp.lt.f32.partialorder %v210, %v231
        %vm247 = vcmp.lt.f32.partialorder %v211, %v231
        %v248 = vsel %vm232, -1.0, 0.0
        %v249 = vsel %vm233, -1.0, 0.0
        %v250 = vsel %vm234, -1.0, 0.0
        %v251 = vsel %vm235, -1.0, 0.0
        %v252 = vsel %vm236, -1.0, 0.0
        %v253 = vsel %vm237, -1.0, 0.0
        %v254 = vsel %vm238, -1.0, 0.0
        %v255 = vsel %vm239, -1.0, 0.0
        %v256 = vsel %vm240, -1.0, 0.0
        %v257 = vsel %vm241, -1.0, 0.0
        %v258 = vsel %vm242, -1.0, 0.0
        %v259 = vsel %vm243, -1.0, 0.0
        %v260 = vsel %vm244, -1.0, 0.0
        %v261 = vsel %vm245, -1.0, 0.0
        %v262 = vsel %vm246, -1.0, 0.0
        %v263 = vsel %vm247, -1.0, 0.0
        %v264 = vsel %vm214, 1.0, %v248
        %v265 = vsel %vm215, 1.0, %v249
        %v266 = vsel %vm216, 1.0, %v250
        %v267 = vsel %vm217, 1.0, %v251
        %v268 = vsel %vm218, 1.0, %v252
        %v269 = vsel %vm219, 1.0, %v253
        %v270 = vsel %vm220, 1.0, %v254
        %v271 = vsel %vm221, 1.0, %v255
        %v272 = vsel %vm222, 1.0, %v256
        %v273 = vsel %vm223, 1.0, %v257
        %v274 = vsel %vm224, 1.0, %v258
        %v275 = vsel %vm225, 1.0, %v259
        %v276 = vsel %vm226, 1.0, %v260
        %v277 = vsel %vm227, 1.0, %v261
        %v278 = vsel %vm228, 1.0, %v262
        %v279 = vsel %vm229, 1.0, %v263
        %v280 = vtrunc.f32 %v264
        %v281 = vtrunc.f32 %v265
        %v282 = vtrunc.f32 %v266
        %v283 = vtrunc.f32 %v267
        %v284 = vtrunc.f32 %v268
        %v285 = vtrunc.f32 %v269
        %v286 = vtrunc.f32 %v270
        %v287 = vtrunc.f32 %v271
        %v288 = vtrunc.f32 %v272
        %v289 = vtrunc.f32 %v273
        %v290 = vtrunc.f32 %v274
        %v291 = vtrunc.f32 %v275
        %v292 = vtrunc.f32 %v276
        %v293 = vtrunc.f32 %v277
        %v294 = vtrunc.f32 %v278
        %v295 = vtrunc.f32 %v279
        %v296 = vpack.c.f32.eXmY %v280, %v281, 312
        %v300 = vpack.c.f32.eXmY %v282, %v283, 312
        %v304 = vpack.c.b8 %v300, %v296
        %v306 = vpack.c.f32.eXmY %v284, %v285, 312
        %v310 = vpack.c.f32.eXmY %v286, %v287, 312
        %v314 = vpack.c.b8 %v310, %v306
        %v316 = vpack.c.f32.eXmY %v288, %v289, 312
        %v320 = vpack.c.f32.eXmY %v290, %v291, 312
        %v324 = vpack.c.b8 %v320, %v316
        %v326 = vpack.c.f32.eXmY %v292, %v293, 312
        %v330 = vpack.c.f32.eXmY %v294, %v295, 312
        %v334 = vpack.c.b8 %v330, %v326
        %336 = vst [vmem:[%s193] sm:$0xff] %v304
        %337 = vst [vmem:[%s193 + $0x8] sm:$0xff] %v314
        %338 = vst [vmem:[%s193 + $0x10] sm:$0xff] %v324
        %339 = vst [vmem:[%s193 + $0x18] sm:$0xff] %v334
        %s340 = sand.u32 %s91, 1
        %s341 = scalar_lea.sflag [#allocation4], %s340
        %s342 = sand.u32 %s91, 1
        %s343 = smul.addr %s342, 32
        %s344 = scalar_lea.vmem [#allocation7], %s343
        // Predicated region
        $region37: #{tpu_custom_call.1} parent=27 // pred_check
          %p345 = pneg %p101
        $region38: #{tpu_custom_call.1} parent=27 // pred_check_branch
          %347 = sbr.rel (%p345) target = $region40
        $region39: #{tpu_custom_call.1} parent=27 // pred_region
          %s348 = smul.u32 4, %s24
          %s350 = ssub.s32 512, 512
          %351 = vsyncadd %s341, %s350
          %s352 = smul.addr %s348, 2
          %s353 = sadd.s32 %s25, %s352
          %s354 = smul.addr %s353, 128
          %s355 = scalar_lea.hbm %s2, %s354
          %s356 = sshll.u32 %s344, 4
          %s357 = int_to_ptr.vmem [resolvable:$true] %s356
          %362 = dma.vmem_to_hbm [thread:$0]  %s357, 512, %s355, %s341, 128, 256, 8
        $region40: #{tpu_custom_call.1} parent=27 // pred_fallthru
          _
      $region28: #{tpu_custom_call.1} parent=5 // pred_fallthru
        _
      %p363 = scmp.le.s32.totalorder 2, %s15
      // Predicated region
      $region41: #{tpu_custom_call.1} parent=5 // pred_check
        %p364 = pneg %p363
      $region42: #{tpu_custom_call.1} parent=5 // pred_check_branch
        %366 = sbr.rel (%p364) target = $region44
      $region43: #{tpu_custom_call.1} parent=5 // pred_region
        %s367 = ssub.s32 %s15, 2
        // Predicated region
        $region45: #{tpu_custom_call.1} parent=43 // pred_check
          %p368 = pneg %p107
        $region46: #{tpu_custom_call.1} parent=43 // pred_check_branch
          %370 = sbr.rel (%p368) target = $region48
        $region47: #{tpu_custom_call.1} parent=43 // pred_region
          %s371 = sand.u32 %s92, 1
          %s372 = scalar_lea.sflag [#allocation4], %s371
          %s373 = sand.u32 %s92, 1
          %s374 = smul.addr %s373, 32
          %s375 = scalar_lea.vmem [#allocation7], %s374
          %376 = dma.done %s372, 512
        $region48: #{tpu_custom_call.1} parent=43 // pred_fallthru
          _
      $region44: #{tpu_custom_call.1} parent=5 // pred_fallthru
        _
    $region6: #{tpu_custom_call.1} parent=1 // loop_footer
      %s19 = sadd.s32 1, %s15
    $region7: #{tpu_custom_call.1} parent=1 // loop_footer_branch
      %14 = sbr.rel target = $region3
    $region8: #{tpu_custom_call.1} parent=1 // loop_exit
      _
    %377 = vsyncpa [#allocation3], 1
    %s378 = scalar_lea.sflag [#allocation3], 1
    %379 = vsyncpa %s378, 1
    %380 = vsyncpa [#allocation4], 1
    %s381 = scalar_lea.sflag [#allocation4], 1
    %382 = vsyncpa %s381, 1
    %383 = vsyncpa [#allocation5], 1
    %s384 = scalar_lea.sflag [#allocation5], 1
    %385 = vsyncpa %s384, 1

</llo_original>
